<compile_context>
chip_gen: v5e
topology: v5e:2x2
jax: 0.10.0
libtpu: 0.0.40
codegen_flags: <defaults>
</compile_context>

<pallas_src>
import functools

import numpy as np
import jax
import jax.numpy as jnp
from jax.experimental import pallas as pl
from jax.experimental.pallas import tpu as pltpu


def _round_up(x, m):
    return ((x + m - 1) // m) * m


def _ps_kernel(*refs, cgs):
    """refs = (c_ref_0, ..., c_ref_{L-1}, o_ref).

    c_ref_l : (2l+1, Q, tile_n)  samples in lanes
    o_ref   : (L, Q, Q, tile_n)
    """
    c_refs = refs[:-1]
    o_ref = refs[-1]
    q = o_ref.shape[1]
    tn = o_ref.shape[-1]

    for li, (c_ref, cg) in enumerate(zip(c_refs, cgs)):
        m_count = c_ref.shape[0]          # 2l+1, static
        acc = jnp.zeros((q, q, tn), jnp.float32)
        # Statically unrolled VPU multiply-accumulate over the component axis.
        for m in range(m_count):
            cm = c_ref[m].astype(jnp.float32)            # (Q, tn)
            # scale one operand by cg (exact: cg * c[m,i,:] * c[m,j,:])
            acc = acc + (cm * cg)[:, None, :] * cm[None, :, :]
        o_ref[li] = acc.astype(o_ref.dtype)


def power_spectrum_species(c_list, *, tile_n=512):
    """c_list[l]: (N, 2l+1, Q) array, l = 0..l_max. Returns (N, (l_max+1)*Q*Q)."""
    N, _, Q = c_list[0].shape
    L = len(c_list)
    dtype = c_list[0].dtype

    # Lane-dense tiling over samples: tile is a multiple of 128, N padded so the
    # grid divides evenly (zero padding -> exact zeros, sliced away below).
    tile_n = max(128, _round_up(int(tile_n), 128))
    tile_n = min(tile_n, _round_up(N, 128))
    n_pad = _round_up(N, tile_n)

    # (N, M, Q) -> (M, Q, n_pad): samples last (lanes). Wrapper-side transpose
    # is the layout plumbing recommended for lane-dense kernel loads/stores.
    c_t = []
    for c in c_list:
        ct = jnp.transpose(c, (1, 2, 0))                       # (M, Q, N)
        ct = jnp.pad(ct, ((0, 0), (0, 0), (0, n_pad - N)))     # (M, Q, n_pad)
        c_t.append(ct)

    cgs = tuple(float(1.0 / np.sqrt(2 * l + 1)) for l in range(L))
    kernel = functools.partial(_ps_kernel, cgs=cgs)

    in_specs = [
        pl.BlockSpec((c.shape[1], Q, tile_n), lambda i: (0, 0, i))
        for c in c_list
    ]
    out_spec = pl.BlockSpec((L, Q, Q, tile_n), lambda i: (0, 0, 0, i))

    out = pl.pallas_call(
        kernel,
        out_shape=jax.ShapeDtypeStruct((L, Q, Q, n_pad), dtype),
        grid_spec=pltpu.PrefetchScalarGridSpec(
            num_scalar_prefetch=0,
            grid=(n_pad // tile_n,),
            in_specs=in_specs,
            out_specs=out_spec,
        ),
        compiler_params=pltpu.CompilerParams(
            dimension_semantics=("parallel",),   # sample tiles shard across TCs
            vmem_limit_bytes=32 * 1024 * 1024,   # safe on v5e/v6e/v7x; footprint ~1-2 MiB
        ),
    )(*c_t)

    # (L, Q, Q, n_pad) -> (N, L*Q*Q), feature index = l*Q*Q + i*Q + j
    out = jnp.transpose(out, (3, 0, 1, 2)).reshape(n_pad, L * Q * Q)
    return out[:N]


def power_spectrum(spex, l_max, all_species, *, tile_n=512):
    """spex: dict mapping (l, a_i) -> values array of shape (N, 2l+1, Q).

    Returns dict: a_i -> (N, (l_max+1) * Q^2) array (TensorMap block values).
    """
    result = {}
    for a_i in all_species:
        c_list = [spex[(l, a_i)] for l in range(l_max + 1)]
        result[a_i] = power_spectrum_species(c_list, tile_n=tile_n)
    return result


def _reference_block(c, l):
    cg = 1.0 / np.sqrt(2 * l + 1)
    ps = cg * jnp.sum(c[:, :, None, :] * c[:, :, :, None], axis=1)
    return ps.reshape(c.shape[0], c.shape[2] ** 2)


if __name__ == "__main__":
    l_max = 2
    all_species = [1, 6]
    n_samples = 4
    n_props = 8

    key = jax.random.PRNGKey(0)
    spex = {}
    for a_i in all_species:
        for l in range(l_max + 1):
            key, sub = jax.random.split(key)
            spex[(l, a_i)] = jax.random.normal(
                sub, (n_samples, 2 * l + 1, n_props), dtype=jnp.float32
            )

    out = power_spectrum(spex, l_max, all_species)
    for a_i in all_species:
        jax.block_until_ready(out[a_i])

    # Correctness check against a pure-JAX reference of the PyTorch math.
    for a_i in all_species:
        ref = jnp.concatenate(
            [_reference_block(spex[(l, a_i)], l) for l in range(l_max + 1)],
            axis=-1,
        )
        assert out[a_i].shape == (n_samples, (l_max + 1) * n_props * n_props)
        np.testing.assert_allclose(
            np.asarray(out[a_i]), np.asarray(ref), rtol=1e-5, atol=1e-5
        )

    print("KERNEL_OK")
</pallas_src>

<mosaic_0001>
module attributes {stable_mosaic.version = 11 : i64} {
  func.func @_ps_kernel(%arg0: i32, %arg1: memref<1x8x128xf32, #tpu.memory_space<vmem>>, %arg2: memref<3x8x128xf32, #tpu.memory_space<vmem>>, %arg3: memref<5x8x128xf32, #tpu.memory_space<vmem>>, %arg4: memref<3x8x8x128xf32, #tpu.memory_space<vmem>>) attributes {dimension_semantics = [#tpu.dimension_semantics<parallel>], iteration_bounds = array<i64: 1>, scalar_prefetch = 0 : i64, scratch_operands = 0 : i64, tpu.core_type = #tpu.core_type<tc>, window_params = [{transform_indices = @transform_0, window_bounds = array<i64: 1, 8, 128>}, {transform_indices = @transform_1, window_bounds = array<i64: 3, 8, 128>}, {transform_indices = @transform_2, window_bounds = array<i64: 5, 8, 128>}, {transform_indices = @transform_3, window_bounds = array<i64: 3, 8, 8, 128>}]} {
    %cst = arith.constant 0.000000e+00 : f32
    %0 = vector.broadcast %cst : f32 to vector<8x8x128xf32>
    %c0 = arith.constant 0 : index
    %c0_0 = arith.constant 0 : index
    %c0_1 = arith.constant 0 : index
    %1 = vector.load %arg1[%c0, %c0_0, %c0_1] : memref<1x8x128xf32, #tpu.memory_space<vmem>>, vector<1x8x128xf32>
    %2 = vector.shape_cast %1 : vector<1x8x128xf32> to vector<8x128xf32>
    %cst_2 = arith.constant 1.000000e+00 : f32
    %3 = vector.broadcast %cst_2 : f32 to vector<8x128xf32>
    %4 = arith.mulf %2, %3 : vector<8x128xf32>
    %5 = vector.shape_cast %4 : vector<8x128xf32> to vector<8x1x128xf32>
    %6 = vector.shape_cast %2 : vector<8x128xf32> to vector<1x8x128xf32>
    %7 = vector.broadcast %5 : vector<8x1x128xf32> to vector<8x8x128xf32>
    %8 = vector.broadcast %6 : vector<1x8x128xf32> to vector<8x8x128xf32>
    %9 = arith.mulf %7, %8 : vector<8x8x128xf32>
    %10 = arith.addf %0, %9 : vector<8x8x128xf32>
    %c0_3 = arith.constant 0 : index
    %c0_4 = arith.constant 0 : index
    %c0_5 = arith.constant 0 : index
    %c0_6 = arith.constant 0 : index
    %11 = vector.load %arg4[%c0_3, %c0_4, %c0_5, %c0_6] : memref<3x8x8x128xf32, #tpu.memory_space<vmem>>, vector<1x8x8x128xf32>
    %12 = vector.shape_cast %11 : vector<1x8x8x128xf32> to vector<8x8x128xf32>
    %13 = vector.shape_cast %10 : vector<8x8x128xf32> to vector<1x8x8x128xf32>
    tpu.vector_store %arg4[%c0_3, %c0_4, %c0_5, %c0_6], %13 {strides = array<i32>} : memref<3x8x8x128xf32, #tpu.memory_space<vmem>>, vector<1x8x8x128xf32>,
    %cst_7 = arith.constant 0.000000e+00 : f32
    %14 = vector.broadcast %cst_7 : f32 to vector<8x8x128xf32>
    %c0_8 = arith.constant 0 : index
    %c0_9 = arith.constant 0 : index
    %c0_10 = arith.constant 0 : index
    %15 = vector.load %arg2[%c0_8, %c0_9, %c0_10] : memref<3x8x128xf32, #tpu.memory_space<vmem>>, vector<1x8x128xf32>
    %16 = vector.shape_cast %15 : vector<1x8x128xf32> to vector<8x128xf32>
    %cst_11 = arith.constant 0.577350259 : f32
    %17 = vector.broadcast %cst_11 : f32 to vector<8x128xf32>
    %18 = arith.mulf %16, %17 : vector<8x128xf32>
    %19 = vector.shape_cast %18 : vector<8x128xf32> to vector<8x1x128xf32>
    %20 = vector.shape_cast %16 : vector<8x128xf32> to vector<1x8x128xf32>
    %21 = vector.broadcast %19 : vector<8x1x128xf32> to vector<8x8x128xf32>
    %22 = vector.broadcast %20 : vector<1x8x128xf32> to vector<8x8x128xf32>
    %23 = arith.mulf %21, %22 : vector<8x8x128xf32>
    %24 = arith.addf %14, %23 : vector<8x8x128xf32>
    %c1 = arith.constant 1 : index
    %c0_12 = arith.constant 0 : index
    %c0_13 = arith.constant 0 : index
    %25 = vector.load %arg2[%c1, %c0_12, %c0_13] : memref<3x8x128xf32, #tpu.memory_space<vmem>>, vector<1x8x128xf32>
    %26 = vector.shape_cast %25 : vector<1x8x128xf32> to vector<8x128xf32>
    %cst_14 = arith.constant 0.577350259 : f32
    %27 = vector.broadcast %cst_14 : f32 to vector<8x128xf32>
    %28 = arith.mulf %26, %27 : vector<8x128xf32>
    %29 = vector.shape_cast %28 : vector<8x128xf32> to vector<8x1x128xf32>
    %30 = vector.shape_cast %26 : vector<8x128xf32> to vector<1x8x128xf32>
    %31 = vector.broadcast %29 : vector<8x1x128xf32> to vector<8x8x128xf32>
    %32 = vector.broadcast %30 : vector<1x8x128xf32> to vector<8x8x128xf32>
    %33 = arith.mulf %31, %32 : vector<8x8x128xf32>
    %34 = arith.addf %24, %33 : vector<8x8x128xf32>
    %c2 = arith.constant 2 : index
    %c0_15 = arith.constant 0 : index
    %c0_16 = arith.constant 0 : index
    %35 = vector.load %arg2[%c2, %c0_15, %c0_16] : memref<3x8x128xf32, #tpu.memory_space<vmem>>, vector<1x8x128xf32>
    %36 = vector.shape_cast %35 : vector<1x8x128xf32> to vector<8x128xf32>
    %cst_17 = arith.constant 0.577350259 : f32
    %37 = vector.broadcast %cst_17 : f32 to vector<8x128xf32>
    %38 = arith.mulf %36, %37 : vector<8x128xf32>
    %39 = vector.shape_cast %38 : vector<8x128xf32> to vector<8x1x128xf32>
    %40 = vector.shape_cast %36 : vector<8x128xf32> to vector<1x8x128xf32>
    %41 = vector.broadcast %39 : vector<8x1x128xf32> to vector<8x8x128xf32>
    %42 = vector.broadcast %40 : vector<1x8x128xf32> to vector<8x8x128xf32>
    %43 = arith.mulf %41, %42 : vector<8x8x128xf32>
    %44 = arith.addf %34, %43 : vector<8x8x128xf32>
    %c1_18 = arith.constant 1 : index
    %c0_19 = arith.constant 0 : index
    %c0_20 = arith.constant 0 : index
    %c0_21 = arith.constant 0 : index
    %45 = vector.load %arg4[%c1_18, %c0_19, %c0_20, %c0_21] : memref<3x8x8x128xf32, #tpu.memory_space<vmem>>, vector<1x8x8x128xf32>
    %46 = vector.shape_cast %45 : vector<1x8x8x128xf32> to vector<8x8x128xf32>
    %47 = vector.shape_cast %44 : vector<8x8x128xf32> to vector<1x8x8x128xf32>
    tpu.vector_store %arg4[%c1_18, %c0_19, %c0_20, %c0_21], %47 {strides = array<i32>} : memref<3x8x8x128xf32, #tpu.memory_space<vmem>>, vector<1x8x8x128xf32>,
    %cst_22 = arith.constant 0.000000e+00 : f32
    %48 = vector.broadcast %cst_22 : f32 to vector<8x8x128xf32>
    %c0_23 = arith.constant 0 : index
    %c0_24 = arith.constant 0 : index
    %c0_25 = arith.constant 0 : index
    %49 = vector.load %arg3[%c0_23, %c0_24, %c0_25] : memref<5x8x128xf32, #tpu.memory_space<vmem>>, vector<1x8x128xf32>
    %50 = vector.shape_cast %49 : vector<1x8x128xf32> to vector<8x128xf32>
    %cst_26 = arith.constant 0.44721359 : f32
    %51 = vector.broadcast %cst_26 : f32 to vector<8x128xf32>
    %52 = arith.mulf %50, %51 : vector<8x128xf32>
    %53 = vector.shape_cast %52 : vector<8x128xf32> to vector<8x1x128xf32>
    %54 = vector.shape_cast %50 : vector<8x128xf32> to vector<1x8x128xf32>
    %55 = vector.broadcast %53 : vector<8x1x128xf32> to vector<8x8x128xf32>
    %56 = vector.broadcast %54 : vector<1x8x128xf32> to vector<8x8x128xf32>
    %57 = arith.mulf %55, %56 : vector<8x8x128xf32>
    %58 = arith.addf %48, %57 : vector<8x8x128xf32>
    %c1_27 = arith.constant 1 : index
    %c0_28 = arith.constant 0 : index
    %c0_29 = arith.constant 0 : index
    %59 = vector.load %arg3[%c1_27, %c0_28, %c0_29] : memref<5x8x128xf32, #tpu.memory_space<vmem>>, vector<1x8x128xf32>
    %60 = vector.shape_cast %59 : vector<1x8x128xf32> to vector<8x128xf32>
    %cst_30 = arith.constant 0.44721359 : f32
    %61 = vector.broadcast %cst_30 : f32 to vector<8x128xf32>
    %62 = arith.mulf %60, %61 : vector<8x128xf32>
    %63 = vector.shape_cast %62 : vector<8x128xf32> to vector<8x1x128xf32>
    %64 = vector.shape_cast %60 : vector<8x128xf32> to vector<1x8x128xf32>
    %65 = vector.broadcast %63 : vector<8x1x128xf32> to vector<8x8x128xf32>
    %66 = vector.broadcast %64 : vector<1x8x128xf32> to vector<8x8x128xf32>
    %67 = arith.mulf %65, %66 : vector<8x8x128xf32>
    %68 = arith.addf %58, %67 : vector<8x8x128xf32>
    %c2_31 = arith.constant 2 : index
    %c0_32 = arith.constant 0 : index
    %c0_33 = arith.constant 0 : index
    %69 = vector.load %arg3[%c2_31, %c0_32, %c0_33] : memref<5x8x128xf32, #tpu.memory_space<vmem>>, vector<1x8x128xf32>
    %70 = vector.shape_cast %69 : vector<1x8x128xf32> to vector<8x128xf32>
    %cst_34 = arith.constant 0.44721359 : f32
    %71 = vector.broadcast %cst_34 : f32 to vector<8x128xf32>
    %72 = arith.mulf %70, %71 : vector<8x128xf32>
    %73 = vector.shape_cast %72 : vector<8x128xf32> to vector<8x1x128xf32>
    %74 = vector.shape_cast %70 : vector<8x128xf32> to vector<1x8x128xf32>
    %75 = vector.broadcast %73 : vector<8x1x128xf32> to vector<8x8x128xf32>
    %76 = vector.broadcast %74 : vector<1x8x128xf32> to vector<8x8x128xf32>
    %77 = arith.mulf %75, %76 : vector<8x8x128xf32>
    %78 = arith.addf %68, %77 : vector<8x8x128xf32>
    %c3 = arith.constant 3 : index
    %c0_35 = arith.constant 0 : index
    %c0_36 = arith.constant 0 : index
    %79 = vector.load %arg3[%c3, %c0_35, %c0_36] : memref<5x8x128xf32, #tpu.memory_space<vmem>>, vector<1x8x128xf32>
    %80 = vector.shape_cast %79 : vector<1x8x128xf32> to vector<8x128xf32>
    %cst_37 = arith.constant 0.44721359 : f32
    %81 = vector.broadcast %cst_37 : f32 to vector<8x128xf32>
    %82 = arith.mulf %80, %81 : vector<8x128xf32>
    %83 = vector.shape_cast %82 : vector<8x128xf32> to vector<8x1x128xf32>
    %84 = vector.shape_cast %80 : vector<8x128xf32> to vector<1x8x128xf32>
    %85 = vector.broadcast %83 : vector<8x1x128xf32> to vector<8x8x128xf32>
    %86 = vector.broadcast %84 : vector<1x8x128xf32> to vector<8x8x128xf32>
    %87 = arith.mulf %85, %86 : vector<8x8x128xf32>
    %88 = arith.addf %78, %87 : vector<8x8x128xf32>
    %c4 = arith.constant 4 : index
    %c0_38 = arith.constant 0 : index
    %c0_39 = arith.constant 0 : index
    %89 = vector.load %arg3[%c4, %c0_38, %c0_39] : memref<5x8x128xf32, #tpu.memory_space<vmem>>, vector<1x8x128xf32>
    %90 = vector.shape_cast %89 : vector<1x8x128xf32> to vector<8x128xf32>
    %cst_40 = arith.constant 0.44721359 : f32
    %91 = vector.broadcast %cst_40 : f32 to vector<8x128xf32>
    %92 = arith.mulf %90, %91 : vector<8x128xf32>
    %93 = vector.shape_cast %92 : vector<8x128xf32> to vector<8x1x128xf32>
    %94 = vector.shape_cast %90 : vector<8x128xf32> to vector<1x8x128xf32>
    %95 = vector.broadcast %93 : vector<8x1x128xf32> to vector<8x8x128xf32>
    %96 = vector.broadcast %94 : vector<1x8x128xf32> to vector<8x8x128xf32>
    %97 = arith.mulf %95, %96 : vector<8x8x128xf32>
    %98 = arith.addf %88, %97 : vector<8x8x128xf32>
    %c2_41 = arith.constant 2 : index
    %c0_42 = arith.constant 0 : index
    %c0_43 = arith.constant 0 : index
    %c0_44 = arith.constant 0 : index
    %99 = vector.load %arg4[%c2_41, %c0_42, %c0_43, %c0_44] : memref<3x8x8x128xf32, #tpu.memory_space<vmem>>, vector<1x8x8x128xf32>
    %100 = vector.shape_cast %99 : vector<1x8x8x128xf32> to vector<8x8x128xf32>
    %101 = vector.shape_cast %98 : vector<8x8x128xf32> to vector<1x8x8x128xf32>
    tpu.vector_store %arg4[%c2_41, %c0_42, %c0_43, %c0_44], %101 {strides = array<i32>} : memref<3x8x8x128xf32, #tpu.memory_space<vmem>>, vector<1x8x8x128xf32>,
    return
  }
  func.func @transform_0(%arg0: i32) -> (i32, i32, i32) {
    %c0_i32 = arith.constant 0 : i32
    %c0_i32_0 = arith.constant 0 : i32
    %c0_i32_1 = arith.constant 0 : i32
    return %c0_i32, %c0_i32_0, %arg0 : i32, i32, i32
  }
  func.func @transform_1(%arg0: i32) -> (i32, i32, i32) {
    %c0_i32 = arith.constant 0 : i32
    %c0_i32_0 = arith.constant 0 : i32
    %c0_i32_1 = arith.constant 0 : i32
    return %c0_i32, %c0_i32_0, %arg0 : i32, i32, i32
  }
  func.func @transform_2(%arg0: i32) -> (i32, i32, i32) {
    %c0_i32 = arith.constant 0 : i32
    %c0_i32_0 = arith.constant 0 : i32
    %c0_i32_1 = arith.constant 0 : i32
    return %c0_i32, %c0_i32_0, %arg0 : i32, i32, i32
  }
  func.func @transform_3(%arg0: i32) -> (i32, i32, i32, i32) {
    %c0_i32 = arith.constant 0 : i32
    %c0_i32_0 = arith.constant 0 : i32
    %c0_i32_1 = arith.constant 0 : i32
    %c0_i32_2 = arith.constant 0 : i32
    return %c0_i32, %c0_i32_0, %c0_i32_1, %arg0 : i32, i32, i32, i32
  }
}

</mosaic_0001>

<llo_original>
// kernel: tpu_custom_call.1
$region0: #{tpu_custom_call.1}
  #allocation0 [shape = 'u32[]', space=smem, size = 0x4, offset = 0x4, fixed_abs, tag = 'smem constant byte address 0x4 - core index']
  #allocation1 [shape = 'u32[72,128]{1,0:T(1,128)}', space=vmem, size = 0x9000, scoped, tag = 'internal scratch']
  %s0 = inlined_call_operand.hbm [shape: f32[1,8,128], index: 0, kind: input, shape index: {}]
  %s1 = inlined_call_operand.hbm [shape: f32[3,8,128], index: 1, kind: input, shape index: {}]
  %s2 = inlined_call_operand.hbm [shape: f32[5,8,128], index: 2, kind: input, shape index: {}]
  %s3 = inlined_call_operand.hbm [shape: f32[3,8,8,128], index: 3, kind: output, shape index: {}]
  %s4 = sld [smem:[#allocation0]]
  $region34: #{tpu_custom_call.1} parent=0
    _
  %s6 = ssub.s32 1, %s4
  %s7 = scalar_select 0, %s6, %s4
  $region1: #{tpu_custom_call.1} parent=0
    #allocation2 [shape = 'u8[4096]{0}', space=vmem, size = 0x1000, scoped, tag = 'input window, operand 0, single buffered']
    #allocation3 [shape = 's32[1]{0}', space=sflag, size = 0x4, scoped, tag = 'scoped memory for tpu_custom_call.1']
    #allocation4 [shape = 's32[1]{0}', space=sflag, size = 0x4, scoped, tag = 'scoped memory for tpu_custom_call.1']
    #allocation5 [shape = 'u8[12288]{0}', space=vmem, size = 0x3000, scoped, tag = 'input window, operand 1, single buffered']
    #allocation6 [shape = 's32[1]{0}', space=sflag, size = 0x4, scoped, tag = 'scoped memory for tpu_custom_call.1']
    #allocation7 [shape = 'u8[20480]{0}', space=vmem, size = 0x5000, scoped, tag = 'input window, operand 2, single buffered']
    #allocation8 [shape = 'u8[98304]{0}', space=vmem, size = 0x18000, scoped, tag = 'output window, operand 0, single buffered']
    %8 = vsyncpa [#allocation3], 0
    %9 = vsyncpa [#allocation6], 0
    %10 = vsyncpa [#allocation4], 0
    // Predicated region
    $region2: #{tpu_custom_call.1} parent=1 // pred_check
      _
    $region3: #{tpu_custom_call.1} parent=1 // pred_check_branch
      %12 = sbr.rel (0) target = $region5
    $region4: #{tpu_custom_call.1} parent=1 // pred_region
      %14 = vsyncadd [#allocation3], 0
      %s16 = sshll.u32 %s0, 4
      %s17 = int_to_ptr.hbm [resolvable:$true] %s16
      %s18 = sshll.u32 [#allocation2], 4
      %s19 = int_to_ptr.vmem [resolvable:$true] %s18
      %21 = dma.hbm_to_vmem [thread:$0]  %s17, 128, %s19, [#allocation3]
    $region5: #{tpu_custom_call.1} parent=1 // pred_fallthru
      _
    // Predicated region
    $region6: #{tpu_custom_call.1} parent=1 // pred_check
      _
    $region7: #{tpu_custom_call.1} parent=1 // pred_check_branch
      %23 = sbr.rel (0) target = $region9
    $region8: #{tpu_custom_call.1} parent=1 // pred_region
      %25 = vsyncadd [#allocation6], 0
      %s26 = sshll.u32 %s1, 4
      %s27 = int_to_ptr.hbm [resolvable:$true] %s26
      %s28 = sshll.u32 [#allocation5], 4
      %s29 = int_to_ptr.vmem [resolvable:$true] %s28
      %34 = dma.hbm_to_vmem [thread:$0]  %s27, 384, %s29, [#allocation6], 128, 128, 8
    $region9: #{tpu_custom_call.1} parent=1 // pred_fallthru
      _
    // Predicated region
    $region10: #{tpu_custom_call.1} parent=1 // pred_check
      _
    $region11: #{tpu_custom_call.1} parent=1 // pred_check_branch
      %36 = sbr.rel (0) target = $region13
    $region12: #{tpu_custom_call.1} parent=1 // pred_region
      %38 = vsyncadd [#allocation6], 0
      %s39 = sshll.u32 %s2, 4
      %s40 = int_to_ptr.hbm [resolvable:$true] %s39
      %s41 = sshll.u32 [#allocation7], 4
      %s42 = int_to_ptr.vmem [resolvable:$true] %s41
      %47 = dma.hbm_to_vmem [thread:$0]  %s40, 640, %s42, [#allocation6], 128, 128, 8
    $region13: #{tpu_custom_call.1} parent=1 // pred_fallthru
      _
    // Predicated region
    $region14: #{tpu_custom_call.1} parent=1 // pred_check
      _
    $region15: #{tpu_custom_call.1} parent=1 // pred_check_branch
      %49 = sbr.rel (0) target = $region17
    $region16: #{tpu_custom_call.1} parent=1 // pred_region
      %51 = dma.done [#allocation3], 128
    $region17: #{tpu_custom_call.1} parent=1 // pred_fallthru
      _
    // Predicated region
    $region18: #{tpu_custom_call.1} parent=1 // pred_check
      _
    $region19: #{tpu_custom_call.1} parent=1 // pred_check_branch
      %53 = sbr.rel (0) target = $region21
    $region20: #{tpu_custom_call.1} parent=1 // pred_region
      %55 = dma.done [#allocation6], 384
    $region21: #{tpu_custom_call.1} parent=1 // pred_fallthru
      _
    // Predicated region
    $region22: #{tpu_custom_call.1} parent=1 // pred_check
      _
    $region23: #{tpu_custom_call.1} parent=1 // pred_check_branch
      %57 = sbr.rel (0) target = $region25
    $region24: #{tpu_custom_call.1} parent=1 // pred_region
      %59 = dma.done [#allocation6], 640
    $region25: #{tpu_custom_call.1} parent=1 // pred_fallthru
      _
    %v60 = vld [vmem:[#allocation2] sm:$0xff]
    %v62 = vrot.slane %v60, 1
    %v63 = vrot.slane %v60, 2
    %v64 = vrot.slane %v60, 3
    %v65 = vrot.slane %v60, 4
    %v66 = vrot.slane %v60, 5
    %v67 = vrot.slane %v60, 6
    %v68 = vrot.slane %v60, 7
    %v69 = vperm.slane %v60, 0
    %v70 = vperm.slane %v62, 0
    %v71 = vperm.slane %v63, 0
    %v72 = vperm.slane %v64, 0
    %v73 = vperm.slane %v65, 0
    %v74 = vperm.slane %v66, 0
    %v75 = vperm.slane %v67, 0
    %v76 = vperm.slane %v68, 0
    %v85 = vmul.f32 %v69, %v60
    %v86 = vmul.f32 %v70, %v60
    %v87 = vmul.f32 %v71, %v60
    %v88 = vmul.f32 %v72, %v60
    %v89 = vmul.f32 %v73, %v60
    %v90 = vmul.f32 %v74, %v60
    %v91 = vmul.f32 %v75, %v60
    %v92 = vmul.f32 %v76, %v60
    %v93 = vadd.f32 %v85, 0.0
    %v94 = vadd.f32 %v86, 0.0
    %v95 = vadd.f32 %v87, 0.0
    %v96 = vadd.f32 %v88, 0.0
    %v97 = vadd.f32 %v89, 0.0
    %v98 = vadd.f32 %v90, 0.0
    %v99 = vadd.f32 %v91, 0.0
    %v100 = vadd.f32 %v92, 0.0
    %101 = vst [vmem:[#allocation8] sm:$0xff] %v93
    %102 = vst [vmem:[#allocation8 + $0x8] sm:$0xff] %v94
    %103 = vst [vmem:[#allocation8 + $0x10] sm:$0xff] %v95
    %104 = vst [vmem:[#allocation8 + $0x18] sm:$0xff] %v96
    %105 = vst [vmem:[#allocation8 + $0x20] sm:$0xff] %v97
    %106 = vst [vmem:[#allocation8 + $0x28] sm:$0xff] %v98
    %107 = vst [vmem:[#allocation8 + $0x30] sm:$0xff] %v99
    %108 = vst [vmem:[#allocation8 + $0x38] sm:$0xff] %v100
    %v109 = vld [vmem:[#allocation5] sm:$0xff]
    %v110 = vmul.f32 %v109, 0.57735026
    %v112 = vrot.slane %v110, 1
    %v113 = vrot.slane %v110, 2
    %v114 = vrot.slane %v110, 3
    %v115 = vrot.slane %v110, 4
    %v116 = vrot.slane %v110, 5
    %v117 = vrot.slane %v110, 6
    %v118 = vrot.slane %v110, 7
    %v119 = vperm.slane %v110, 0
    %v120 = vperm.slane %v112, 0
    %v121 = vperm.slane %v113, 0
    %v122 = vperm.slane %v114, 0
    %v123 = vperm.slane %v115, 0
    %v124 = vperm.slane %v116, 0
    %v125 = vperm.slane %v117, 0
    %v126 = vperm.slane %v118, 0
    %v135 = vmul.f32 %v119, %v109
    %v136 = vmul.f32 %v120, %v109
    %v137 = vmul.f32 %v121, %v109
    %v138 = vmul.f32 %v122, %v109
    %v139 = vmul.f32 %v123, %v109
    %v140 = vmul.f32 %v124, %v109
    %v141 = vmul.f32 %v125, %v109
    %v142 = vmul.f32 %v126, %v109
    %v143 = vadd.f32 %v135, 0.0
    %v144 = vadd.f32 %v136, 0.0
    %v145 = vadd.f32 %v137, 0.0
    %v146 = vadd.f32 %v138, 0.0
    %v147 = vadd.f32 %v139, 0.0
    %v148 = vadd.f32 %v140, 0.0
    %v149 = vadd.f32 %v141, 0.0
    %v150 = vadd.f32 %v142, 0.0
    %s151 = scalar_lea.vmem [#allocation5], 8
    %v152 = vld [vmem:[%s151] sm:$0xff]
    %v153 = vmul.f32 %v152, 0.57735026
    %v155 = vrot.slane %v153, 1
    %v156 = vrot.slane %v153, 2
    %v157 = vrot.slane %v153, 3
    %v158 = vrot.slane %v153, 4
    %v159 = vrot.slane %v153, 5
    %v160 = vrot.slane %v153, 6
    %v161 = vrot.slane %v153, 7
    %v162 = vperm.slane %v153, 0
    %v163 = vperm.slane %v155, 0
    %v164 = vperm.slane %v156, 0
    %v165 = vperm.slane %v157, 0
    %v166 = vperm.slane %v158, 0
    %v167 = vperm.slane %v159, 0
    %v168 = vperm.slane %v160, 0
    %v169 = vperm.slane %v161, 0
    %v178 = vmul.f32 %v162, %v152
    %v179 = vmul.f32 %v163, %v152
    %v180 = vmul.f32 %v164, %v152
    %v181 = vmul.f32 %v165, %v152
    %v182 = vmul.f32 %v166, %v152
    %v183 = vmul.f32 %v167, %v152
    %v184 = vmul.f32 %v168, %v152
    %v185 = vmul.f32 %v169, %v152
    %v186 = vadd.f32 %v143, %v178
    %v187 = vadd.f32 %v144, %v179
    %v188 = vadd.f32 %v145, %v180
    %v189 = vadd.f32 %v146, %v181
    %v190 = vadd.f32 %v147, %v182
    %v191 = vadd.f32 %v148, %v183
    %v192 = vadd.f32 %v149, %v184
    %v193 = vadd.f32 %v150, %v185
    %s194 = scalar_lea.vmem [#allocation5], 16
    %v195 = vld [vmem:[%s194] sm:$0xff]
    %v196 = vmul.f32 %v195, 0.57735026
    %v198 = vrot.slane %v196, 1
    %v199 = vrot.slane %v196, 2
    %v200 = vrot.slane %v196, 3
    %v201 = vrot.slane %v196, 4
    %v202 = vrot.slane %v196, 5
    %v203 = vrot.slane %v196, 6
    %v204 = vrot.slane %v196, 7
    %v205 = vperm.slane %v196, 0
    %v206 = vperm.slane %v198, 0
    %v207 = vperm.slane %v199, 0
    %v208 = vperm.slane %v200, 0
    %v209 = vperm.slane %v201, 0
    %v210 = vperm.slane %v202, 0
    %v211 = vperm.slane %v203, 0
    %v212 = vperm.slane %v204, 0
    %v221 = vmul.f32 %v205, %v195
    %v222 = vmul.f32 %v206, %v195
    %v223 = vmul.f32 %v207, %v195
    %v224 = vmul.f32 %v208, %v195
    %v225 = vmul.f32 %v209, %v195
    %v226 = vmul.f32 %v210, %v195
    %v227 = vmul.f32 %v211, %v195
    %v228 = vmul.f32 %v212, %v195
    %v229 = vadd.f32 %v186, %v221
    %v230 = vadd.f32 %v187, %v222
    %v231 = vadd.f32 %v188, %v223
    %v232 = vadd.f32 %v189, %v224
    %v233 = vadd.f32 %v190, %v225
    %v234 = vadd.f32 %v191, %v226
    %v235 = vadd.f32 %v192, %v227
    %v236 = vadd.f32 %v193, %v228
    %s237 = scalar_lea.vmem [#allocation8], 64
    %238 = vst [vmem:[%s237] sm:$0xff] %v229
    %239 = vst [vmem:[%s237 + $0x8] sm:$0xff] %v230
    %240 = vst [vmem:[%s237 + $0x10] sm:$0xff] %v231
    %241 = vst [vmem:[%s237 + $0x18] sm:$0xff] %v232
    %242 = vst [vmem:[%s237 + $0x20] sm:$0xff] %v233
    %243 = vst [vmem:[%s237 + $0x28] sm:$0xff] %v234
    %244 = vst [vmem:[%s237 + $0x30] sm:$0xff] %v235
    %245 = vst [vmem:[%s237 + $0x38] sm:$0xff] %v236
    %v246 = vld [vmem:[#allocation7] sm:$0xff]
    %v247 = vmul.f32 %v246, 0.4472136
    %v249 = vrot.slane %v247, 1
    %v250 = vrot.slane %v247, 2
    %v251 = vrot.slane %v247, 3
    %v252 = vrot.slane %v247, 4
    %v253 = vrot.slane %v247, 5
    %v254 = vrot.slane %v247, 6
    %v255 = vrot.slane %v247, 7
    %v256 = vperm.slane %v247, 0
    %v257 = vperm.slane %v249, 0
    %v258 = vperm.slane %v250, 0
    %v259 = vperm.slane %v251, 0
    %v260 = vperm.slane %v252, 0
    %v261 = vperm.slane %v253, 0
    %v262 = vperm.slane %v254, 0
    %v263 = vperm.slane %v255, 0
    %v272 = vmul.f32 %v256, %v246
    %v273 = vmul.f32 %v257, %v246
    %v274 = vmul.f32 %v258, %v246
    %v275 = vmul.f32 %v259, %v246
    %v276 = vmul.f32 %v260, %v246
    %v277 = vmul.f32 %v261, %v246
    %v278 = vmul.f32 %v262, %v246
    %v279 = vmul.f32 %v263, %v246
    %v280 = vadd.f32 %v272, 0.0
    %v281 = vadd.f32 %v273, 0.0
    %v282 = vadd.f32 %v274, 0.0
    %v283 = vadd.f32 %v275, 0.0
    %v284 = vadd.f32 %v276, 0.0
    %v285 = vadd.f32 %v277, 0.0
    %v286 = vadd.f32 %v278, 0.0
    %v287 = vadd.f32 %v279, 0.0
    %s288 = scalar_lea.vmem [#allocation7], 8
    %v289 = vld [vmem:[%s288] sm:$0xff]
    %v290 = vmul.f32 %v289, 0.4472136
    %v292 = vrot.slane %v290, 1
    %v293 = vrot.slane %v290, 2
    %v294 = vrot.slane %v290, 3
    %v295 = vrot.slane %v290, 4
    %v296 = vrot.slane %v290, 5
    %v297 = vrot.slane %v290, 6
    %v298 = vrot.slane %v290, 7
    %v299 = vperm.slane %v290, 0
    %v300 = vperm.slane %v292, 0
    %v301 = vperm.slane %v293, 0
    %v302 = vperm.slane %v294, 0
    %v303 = vperm.slane %v295, 0
    %v304 = vperm.slane %v296, 0
    %v305 = vperm.slane %v297, 0
    %v306 = vperm.slane %v298, 0
    %v315 = vmul.f32 %v299, %v289
    %v316 = vmul.f32 %v300, %v289
    %v317 = vmul.f32 %v301, %v289
    %v318 = vmul.f32 %v302, %v289
    %v319 = vmul.f32 %v303, %v289
    %v320 = vmul.f32 %v304, %v289
    %v321 = vmul.f32 %v305, %v289
    %v322 = vmul.f32 %v306, %v289
    %v323 = vadd.f32 %v280, %v315
    %v324 = vadd.f32 %v281, %v316
    %v325 = vadd.f32 %v282, %v317
    %v326 = vadd.f32 %v283, %v318
    %v327 = vadd.f32 %v284, %v319
    %v328 = vadd.f32 %v285, %v320
    %v329 = vadd.f32 %v286, %v321
    %v330 = vadd.f32 %v287, %v322
    %s331 = scalar_lea.vmem [#allocation7], 16
    %v332 = vld [vmem:[%s331] sm:$0xff]
    %v333 = vmul.f32 %v332, 0.4472136
    %v335 = vrot.slane %v333, 1
    %v336 = vrot.slane %v333, 2
    %v337 = vrot.slane %v333, 3
    %v338 = vrot.slane %v333, 4
    %v339 = vrot.slane %v333, 5
    %v340 = vrot.slane %v333, 6
    %v341 = vrot.slane %v333, 7
    %v342 = vperm.slane %v333, 0
    %v343 = vperm.slane %v335, 0
    %v344 = vperm.slane %v336, 0
    %v345 = vperm.slane %v337, 0
    %v346 = vperm.slane %v338, 0
    %v347 = vperm.slane %v339, 0
    %v348 = vperm.slane %v340, 0
    %v349 = vperm.slane %v341, 0
    %v358 = vmul.f32 %v342, %v332
    %v359 = vmul.f32 %v343, %v332
    %v360 = vmul.f32 %v344, %v332
    %v361 = vmul.f32 %v345, %v332
    %v362 = vmul.f32 %v346, %v332
    %v363 = vmul.f32 %v347, %v332
    %v364 = vmul.f32 %v348, %v332
    %v365 = vmul.f32 %v349, %v332
    %v366 = vadd.f32 %v323, %v358
    %v367 = vadd.f32 %v324, %v359
    %v368 = vadd.f32 %v325, %v360
    %v369 = vadd.f32 %v326, %v361
    %v370 = vadd.f32 %v327, %v362
    %v371 = vadd.f32 %v328, %v363
    %v372 = vadd.f32 %v329, %v364
    %v373 = vadd.f32 %v330, %v365
    %s374 = scalar_lea.vmem [#allocation7], 24
    %v375 = vld [vmem:[%s374] sm:$0xff]
    %v376 = vmul.f32 %v375, 0.4472136
    %v378 = vrot.slane %v376, 1
    %v379 = vrot.slane %v376, 2
    %v380 = vrot.slane %v376, 3
    %v381 = vrot.slane %v376, 4
    %v382 = vrot.slane %v376, 5
    %v383 = vrot.slane %v376, 6
    %v384 = vrot.slane %v376, 7
    %v385 = vperm.slane %v376, 0
    %v386 = vperm.slane %v378, 0
    %v387 = vperm.slane %v379, 0
    %v388 = vperm.slane %v380, 0
    %v389 = vperm.slane %v381, 0
    %v390 = vperm.slane %v382, 0
    %v391 = vperm.slane %v383, 0
    %v392 = vperm.slane %v384, 0
    %v401 = vmul.f32 %v385, %v375
    %v402 = vmul.f32 %v386, %v375
    %v403 = vmul.f32 %v387, %v375
    %v404 = vmul.f32 %v388, %v375
    %v405 = vmul.f32 %v389, %v375
    %v406 = vmul.f32 %v390, %v375
    %v407 = vmul.f32 %v391, %v375
    %v408 = vmul.f32 %v392, %v375
    %v409 = vadd.f32 %v366, %v401
    %v410 = vadd.f32 %v367, %v402
    %v411 = vadd.f32 %v368, %v403
    %v412 = vadd.f32 %v369, %v404
    %v413 = vadd.f32 %v370, %v405
    %v414 = vadd.f32 %v371, %v406
    %v415 = vadd.f32 %v372, %v407
    %v416 = vadd.f32 %v373, %v408
    %s417 = scalar_lea.vmem [#allocation7], 32
    %v418 = vld [vmem:[%s417] sm:$0xff]
    %v419 = vmul.f32 %v418, 0.4472136
    %v421 = vrot.slane %v419, 1
    %v422 = vrot.slane %v419, 2
    %v423 = vrot.slane %v419, 3
    %v424 = vrot.slane %v419, 4
    %v425 = vrot.slane %v419, 5
    %v426 = vrot.slane %v419, 6
    %v427 = vrot.slane %v419, 7
    %v428 = vperm.slane %v419, 0
    %v429 = vperm.slane %v421, 0
    %v430 = vperm.slane %v422, 0
    %v431 = vperm.slane %v423, 0
    %v432 = vperm.slane %v424, 0
    %v433 = vperm.slane %v425, 0
    %v434 = vperm.slane %v426, 0
    %v435 = vperm.slane %v427, 0
    %v444 = vmul.f32 %v428, %v418
    %v445 = vmul.f32 %v429, %v418
    %v446 = vmul.f32 %v430, %v418
    %v447 = vmul.f32 %v431, %v418
    %v448 = vmul.f32 %v432, %v418
    %v449 = vmul.f32 %v433, %v418
    %v450 = vmul.f32 %v434, %v418
    %v451 = vmul.f32 %v435, %v418
    %v452 = vadd.f32 %v409, %v444
    %v453 = vadd.f32 %v410, %v445
    %v454 = vadd.f32 %v411, %v446
    %v455 = vadd.f32 %v412, %v447
    %v456 = vadd.f32 %v413, %v448
    %v457 = vadd.f32 %v414, %v449
    %v458 = vadd.f32 %v415, %v450
    %v459 = vadd.f32 %v416, %v451
    %s460 = scalar_lea.vmem [#allocation8], 128
    %461 = vst [vmem:[%s460] sm:$0xff] %v452
    %462 = vst [vmem:[%s460 + $0x8] sm:$0xff] %v453
    %463 = vst [vmem:[%s460 + $0x10] sm:$0xff] %v454
    %464 = vst [vmem:[%s460 + $0x18] sm:$0xff] %v455
    %465 = vst [vmem:[%s460 + $0x20] sm:$0xff] %v456
    %466 = vst [vmem:[%s460 + $0x28] sm:$0xff] %v457
    %467 = vst [vmem:[%s460 + $0x30] sm:$0xff] %v458
    %468 = vst [vmem:[%s460 + $0x38] sm:$0xff] %v459
    // Predicated region
    $region26: #{tpu_custom_call.1} parent=1 // pred_check
      _
    $region27: #{tpu_custom_call.1} parent=1 // pred_check_branch
      %470 = sbr.rel (0) target = $region29
    $region28: #{tpu_custom_call.1} parent=1 // pred_region
      %472 = vsyncadd [#allocation4], 0
      %s473 = sshll.u32 [#allocation8], 4
      %s474 = int_to_ptr.vmem [resolvable:$true] %s473
      %s475 = sshll.u32 %s3, 4
      %s476 = int_to_ptr.hbm [resolvable:$true] %s475
      %481 = dma.vmem_to_hbm [thread:$0]  %s474, 3072, %s476, [#allocation4], 128, 128, 8
    $region29: #{tpu_custom_call.1} parent=1 // pred_fallthru
      _
    // Predicated region
    $region30: #{tpu_custom_call.1} parent=1 // pred_check
      _
    $region31: #{tpu_custom_call.1} parent=1 // pred_check_branch
      %483 = sbr.rel (0) target = $region33
    $region32: #{tpu_custom_call.1} parent=1 // pred_region
      %485 = dma.done [#allocation4], 3072
    $region33: #{tpu_custom_call.1} parent=1 // pred_fallthru
      _
    %486 = vsyncpa [#allocation3], 1
    %487 = vsyncpa [#allocation6], 1
    %488 = vsyncpa [#allocation4], 1

</llo_original>
